<compile_context>
chip_gen: v7x
topology: tpu7x:2x2x1
jax: 0.10.0
libtpu: 0.0.40
codegen_flags: <defaults>
</compile_context>

<pallas_src>
import functools

import jax
import jax.numpy as jnp
from jax.experimental import pallas as pl
from jax.experimental.pallas import tpu as pltpu


def _latent_layer_kernel(*refs, num_layers, n_used):
    """One (Cin, TP) pixel tile -> (Lo, TP) mu and sigma tiles.

    refs layout:
      [x, w_in, b_in, w_h_0..w_h_{n_used-1}, b_h_0..b_h_{n_used-1},
       w_out, b_out, mu_out, sigma_out]
    Channels on sublanes, pixels on lanes; every matmul is W @ X.
    """
    x_ref, w_in_ref, b_in_ref = refs[0], refs[1], refs[2]
    w_h_refs = refs[3:3 + n_used]
    b_h_refs = refs[3 + n_used:3 + 2 * n_used]
    w_out_ref = refs[3 + 2 * n_used]
    b_out_ref = refs[4 + 2 * n_used]
    mu_ref = refs[5 + 2 * n_used]
    sigma_ref = refs[6 + 2 * n_used]

    # enc_in: 1x1 conv == (M, Cin) @ (Cin, TP) + b
    h = jnp.dot(w_in_ref[...], x_ref[...],
                preferred_element_type=jnp.float32) + b_in_ref[...]

    # Apply the first `num_layers` modules of enc_hidden = [Conv, ReLU, ...],
    # exactly as the PyTorch forward does (even index -> Conv, odd -> ReLU).
    for i in range(num_layers):
        if i % 2 == 0:
            w = w_h_refs[i // 2]
            h = jnp.dot(w[...], h.astype(w.dtype),
                        preferred_element_type=jnp.float32) + b_h_refs[i // 2][...]
        else:
            h = jnp.maximum(h, 0.0)

    # Fused enc_out_1 | enc_out_2 projection: (2*Lo, M) @ (M, TP) + b, clamp 10.
    out = jnp.dot(w_out_ref[...], h.astype(w_out_ref.dtype),
                  preferred_element_type=jnp.float32) + b_out_ref[...]
    out = jnp.minimum(out, 10.0)
    lo = mu_ref.shape[0]
    mu_ref[...] = out[:lo].astype(mu_ref.dtype)
    sigma_ref[...] = out[lo:].astype(sigma_ref.dtype)


def latent_layer(x, params, *, num_layers=2, tile_pixels=1024, use_bf16=False):
    """x: (B, hidden_dim + latent_dim_in, N, T) -> (mu, sigma), each (B, latent_dim_out, N, T)."""
    B, Cin, N, T = x.shape
    W_in, b_in = params["W_in"], params["b_in"]        # (M, Cin), (M,)
    W_h, b_h = params["W_h"], params["b_h"]            # (num_layers, M, M), (num_layers, M)
    W_o1, b_o1 = params["W_o1"], params["b_o1"]        # (Lo, M), (Lo,)
    W_o2, b_o2 = params["W_o2"], params["b_o2"]        # (Lo, M), (Lo,)
    M = W_in.shape[0]
    Lo = W_o1.shape[0]
    n_used = (num_layers + 1) // 2      # convs actually reached by the forward loop

    # ---- layout plumbing (all free or tiny; NO transposes of x) ----
    P = N * T
    x3 = x.reshape(B, Cin, P)                           # free reshape of NCHW
    P_pad = ((P + 127) // 128) * 128
    if P_pad != P:
        # Only hit when N*T is not a multiple of 128 (one small extra pass).
        x3 = jnp.pad(x3, ((0, 0), (0, 0), (0, P_pad - P)))

    # Largest pixel tile that is a multiple of 128, divides P_pad, and is <= cap.
    cap = max(128, min(tile_pixels, P_pad))
    TP = 128
    for cand in range(cap - cap % 128, 127, -128):
        if P_pad % cand == 0:
            TP = cand
            break

    wt = jnp.bfloat16 if use_bf16 else x.dtype
    x3 = x3.astype(wt)
    w_in = W_in.astype(wt)                                                # (M, Cin)
    b_in2 = b_in.astype(jnp.float32)[:, None]                             # (M, 1)
    w_hs = [W_h[i].astype(wt) for i in range(n_used)]                     # (M, M)
    b_hs = [b_h[i].astype(jnp.float32)[:, None] for i in range(n_used)]   # (M, 1)
    w_out = jnp.concatenate([W_o1, W_o2], axis=0).astype(wt)              # (2*Lo, M)
    b_out2 = jnp.concatenate([b_o1, b_o2]).astype(jnp.float32)[:, None]   # (2*Lo, 1)

    grid = (B, P_pad // TP)

    def const_spec(shape):
        return pl.BlockSpec(shape, lambda b, p: (0,) * len(shape))

    in_specs = (
        [pl.BlockSpec((None, Cin, TP), lambda b, p: (b, 0, p))]   # pixel tile
        + [const_spec((M, Cin)), const_spec((M, 1))]              # enc_in W, b
        + [const_spec((M, M)) for _ in range(n_used)]             # hidden conv W
        + [const_spec((M, 1)) for _ in range(n_used)]             # hidden conv b
        + [const_spec((2 * Lo, M)), const_spec((2 * Lo, 1))]      # fused heads W, b
    )
    out_spec = pl.BlockSpec((None, Lo, TP), lambda b, p: (b, 0, p))

    flops = 2 * B * P_pad * (Cin * M + n_used * M * M + M * 2 * Lo)
    weight_bytes = sum(int(a.size) * a.dtype.itemsize
                       for a in [w_in, b_in2, w_out, b_out2] + w_hs + b_hs)
    bytes_accessed = (int(x3.size) * x3.dtype.itemsize
                      + 2 * B * Lo * P_pad * 4 + weight_bytes)

    kernel = functools.partial(_latent_layer_kernel,
                               num_layers=num_layers, n_used=n_used)

    mu3, sigma3 = pl.pallas_call(
        kernel,
        out_shape=(jax.ShapeDtypeStruct((B, Lo, P_pad), jnp.float32),
                   jax.ShapeDtypeStruct((B, Lo, P_pad), jnp.float32)),
        grid_spec=pl.GridSpec(grid=grid, in_specs=in_specs,
                              out_specs=(out_spec, out_spec)),
        compiler_params=pltpu.CompilerParams(
            dimension_semantics=("parallel", "parallel"),
            vmem_limit_bytes=32 * 1024 * 1024),
        cost_estimate=pl.CostEstimate(flops=flops, transcendentals=0,
                                      bytes_accessed=bytes_accessed),
    )(x3, w_in, b_in2, *w_hs, *b_hs, w_out, b_out2)

    mu = mu3[:, :, :P].reshape(B, Lo, N, T)      # :P slice is a no-op when P_pad == P
    sigma = sigma3[:, :, :P].reshape(B, Lo, N, T)
    return mu, sigma


def latent_layer_reference(x, params, *, num_layers=2):
    """Pure-JAX transcription of the PyTorch forward (for validation)."""
    def conv1x1(h, W, b):
        return jnp.einsum('bchw,oc->bohw', h, W) + b[None, :, None, None]

    h = conv1x1(x, params["W_in"], params["b_in"])
    for i in range(num_layers):
        if i % 2 == 0:
            h = conv1x1(h, params["W_h"][i // 2], params["b_h"][i // 2])
        else:
            h = jnp.maximum(h, 0.0)
    mu = jnp.minimum(conv1x1(h, params["W_o1"], params["b_o1"]), 10.0)
    sigma = jnp.minimum(conv1x1(h, params["W_o2"], params["b_o2"]), 10.0)
    return mu, sigma


if __name__ == "__main__":
    B, N, T = 2, 16, 8
    hidden_dim, latent_dim_in = 32, 16
    middle_dim, latent_dim_out = 32, 32     # equal: matches the module's implicit broadcast requirement
    num_layers = 2
    Cin = hidden_dim + latent_dim_in

    key = jax.random.PRNGKey(0)
    ks = jax.random.split(key, 9)
    x = jax.random.normal(ks[0], (B, Cin, N, T), jnp.float32)
    params = dict(
        W_in=jax.random.normal(ks[1], (middle_dim, Cin), jnp.float32) * 0.1,
        b_in=jax.random.normal(ks[2], (middle_dim,), jnp.float32) * 0.1,
        W_h=jax.random.normal(ks[3], (num_layers, middle_dim, middle_dim), jnp.float32) * 0.1,
        b_h=jax.random.normal(ks[4], (num_layers, middle_dim), jnp.float32) * 0.1,
        W_o1=jax.random.normal(ks[5], (latent_dim_out, middle_dim), jnp.float32) * 0.1,
        b_o1=jax.random.normal(ks[6], (latent_dim_out,), jnp.float32) * 0.1,
        W_o2=jax.random.normal(ks[7], (latent_dim_out, middle_dim), jnp.float32) * 0.1,
        b_o2=jax.random.normal(ks[8], (latent_dim_out,), jnp.float32) * 0.1,
    )

    mu, sigma = latent_layer(x, params, num_layers=num_layers)
    mu = jax.block_until_ready(mu)
    sigma = jax.block_until_ready(sigma)

    mu_ref, sigma_ref = latent_layer_reference(x, params, num_layers=num_layers)
    assert mu.shape == (B, latent_dim_out, N, T)
    assert sigma.shape == (B, latent_dim_out, N, T)
    err = max(float(jnp.max(jnp.abs(mu - mu_ref))),
              float(jnp.max(jnp.abs(sigma - sigma_ref))))
    assert jnp.allclose(mu, mu_ref, rtol=1e-2, atol=1e-2), f"mu max abs err {err}"
    assert jnp.allclose(sigma, sigma_ref, rtol=1e-2, atol=1e-2), f"sigma max abs err {err}"
    print("KERNEL_OK")
</pallas_src>

<mosaic_0001>
module attributes {stable_mosaic.version = 11 : i64} {
  func.func @_latent_layer_kernel(%arg0: i32, %arg1: i32, %arg2: memref<1x48x128xf32, #tpu.memory_space<vmem>>, %arg3: memref<32x48xf32, #tpu.memory_space<vmem>>, %arg4: memref<32x1xf32, #tpu.memory_space<vmem>>, %arg5: memref<32x32xf32, #tpu.memory_space<vmem>>, %arg6: memref<32x1xf32, #tpu.memory_space<vmem>>, %arg7: memref<64x32xf32, #tpu.memory_space<vmem>>, %arg8: memref<64x1xf32, #tpu.memory_space<vmem>>, %arg9: memref<1x32x128xf32, #tpu.memory_space<vmem>>, %arg10: memref<1x32x128xf32, #tpu.memory_space<vmem>>) attributes {dimension_semantics = [#tpu.dimension_semantics<parallel>, #tpu.dimension_semantics<parallel>], iteration_bounds = array<i64: 2, 1>, scalar_prefetch = 0 : i64, scratch_operands = 0 : i64, tpu.core_type = #tpu.core_type<tc>, window_params = [{transform_indices = @transform_0, window_bounds = array<i64: 1, 48, 128>}, {pipeline_mode = #tpu.pipeline_mode<synchronous>, transform_indices = @transform_1, window_bounds = array<i64: 32, 48>}, {pipeline_mode = #tpu.pipeline_mode<synchronous>, transform_indices = @transform_2, window_bounds = array<i64: 32, 1>}, {pipeline_mode = #tpu.pipeline_mode<synchronous>, transform_indices = @transform_3, window_bounds = array<i64: 32, 32>}, {pipeline_mode = #tpu.pipeline_mode<synchronous>, transform_indices = @transform_4, window_bounds = array<i64: 32, 1>}, {pipeline_mode = #tpu.pipeline_mode<synchronous>, transform_indices = @transform_5, window_bounds = array<i64: 64, 32>}, {pipeline_mode = #tpu.pipeline_mode<synchronous>, transform_indices = @transform_6, window_bounds = array<i64: 64, 1>}, {transform_indices = @transform_7, window_bounds = array<i64: 1, 32, 128>}, {transform_indices = @transform_8, window_bounds = array<i64: 1, 32, 128>}]} {
    %c0 = arith.constant 0 : index
    %c0_0 = arith.constant 0 : index
    %0 = vector.load %arg3[%c0, %c0_0] : memref<32x48xf32, #tpu.memory_space<vmem>>, vector<32x48xf32>
    %c0_1 = arith.constant 0 : index
    %c0_2 = arith.constant 0 : index
    %c0_3 = arith.constant 0 : index
    %1 = vector.load %arg2[%c0_1, %c0_2, %c0_3] : memref<1x48x128xf32, #tpu.memory_space<vmem>>, vector<1x48x128xf32>
    %2 = vector.shape_cast %1 : vector<1x48x128xf32> to vector<48x128xf32>
    %cst = arith.constant dense<0.000000e+00> : vector<32x128xf32>
    %3 = tpu.matmul %0, %2, %cst {dimension_numbers = #tpu.dot_dimension_numbers<[1], [0], [0], [1], [0, 0, 1, 1], [], []>} : vector<32x48xf32>, vector<48x128xf32>, vector<32x128xf32> -> vector<32x128xf32>
    %c0_4 = arith.constant 0 : index
    %c0_5 = arith.constant 0 : index
    %4 = vector.load %arg4[%c0_4, %c0_5] : memref<32x1xf32, #tpu.memory_space<vmem>>, vector<32x1xf32>
    %5 = vector.broadcast %4 : vector<32x1xf32> to vector<32x128xf32>
    %6 = arith.addf %3, %5 : vector<32x128xf32>
    %c0_6 = arith.constant 0 : index
    %c0_7 = arith.constant 0 : index
    %7 = vector.load %arg5[%c0_6, %c0_7] : memref<32x32xf32, #tpu.memory_space<vmem>>, vector<32x32xf32>
    %cst_8 = arith.constant dense<0.000000e+00> : vector<32x128xf32>
    %8 = tpu.matmul %7, %6, %cst_8 {dimension_numbers = #tpu.dot_dimension_numbers<[1], [0], [0], [1], [0, 0, 1, 1], [], []>} : vector<32x32xf32>, vector<32x128xf32>, vector<32x128xf32> -> vector<32x128xf32>
    %c0_9 = arith.constant 0 : index
    %c0_10 = arith.constant 0 : index
    %9 = vector.load %arg6[%c0_9, %c0_10] : memref<32x1xf32, #tpu.memory_space<vmem>>, vector<32x1xf32>
    %10 = vector.broadcast %9 : vector<32x1xf32> to vector<32x128xf32>
    %11 = arith.addf %8, %10 : vector<32x128xf32>
    %cst_11 = arith.constant 0.000000e+00 : f32
    %12 = vector.broadcast %cst_11 : f32 to vector<32x128xf32>
    %13 = arith.maximumf %11, %12 : vector<32x128xf32>
    %c0_12 = arith.constant 0 : index
    %c0_13 = arith.constant 0 : index
    %14 = vector.load %arg7[%c0_12, %c0_13] : memref<64x32xf32, #tpu.memory_space<vmem>>, vector<64x32xf32>
    %cst_14 = arith.constant dense<0.000000e+00> : vector<64x128xf32>
    %15 = tpu.matmul %14, %13, %cst_14 {dimension_numbers = #tpu.dot_dimension_numbers<[1], [0], [0], [1], [0, 0, 1, 1], [], []>} : vector<64x32xf32>, vector<32x128xf32>, vector<64x128xf32> -> vector<64x128xf32>
    %c0_15 = arith.constant 0 : index
    %c0_16 = arith.constant 0 : index
    %16 = vector.load %arg8[%c0_15, %c0_16] : memref<64x1xf32, #tpu.memory_space<vmem>>, vector<64x1xf32>
    %17 = vector.broadcast %16 : vector<64x1xf32> to vector<64x128xf32>
    %18 = arith.addf %15, %17 : vector<64x128xf32>
    %cst_17 = arith.constant 1.000000e+01 : f32
    %19 = vector.broadcast %cst_17 : f32 to vector<64x128xf32>
    %20 = arith.minimumf %18, %19 : vector<64x128xf32>
    %21 = vector.extract_strided_slice %20 {offsets = [0, 0], sizes = [32, 128], strides = [1, 1]} : vector<64x128xf32> to vector<32x128xf32>
    %c0_18 = arith.constant 0 : index
    %c0_19 = arith.constant 0 : index
    %c0_20 = arith.constant 0 : index
    %22 = vector.load %arg9[%c0_18, %c0_19, %c0_20] : memref<1x32x128xf32, #tpu.memory_space<vmem>>, vector<1x32x128xf32>
    %23 = vector.shape_cast %22 : vector<1x32x128xf32> to vector<32x128xf32>
    %24 = vector.shape_cast %21 : vector<32x128xf32> to vector<1x32x128xf32>
    tpu.vector_store %arg9[%c0_18, %c0_19, %c0_20], %24 {strides = array<i32>} : memref<1x32x128xf32, #tpu.memory_space<vmem>>, vector<1x32x128xf32>,
    %25 = vector.extract_strided_slice %20 {offsets = [32, 0], sizes = [32, 128], strides = [1, 1]} : vector<64x128xf32> to vector<32x128xf32>
    %c0_21 = arith.constant 0 : index
    %c0_22 = arith.constant 0 : index
    %c0_23 = arith.constant 0 : index
    %26 = vector.load %arg10[%c0_21, %c0_22, %c0_23] : memref<1x32x128xf32, #tpu.memory_space<vmem>>, vector<1x32x128xf32>
    %27 = vector.shape_cast %26 : vector<1x32x128xf32> to vector<32x128xf32>
    %28 = vector.shape_cast %25 : vector<32x128xf32> to vector<1x32x128xf32>
    tpu.vector_store %arg10[%c0_21, %c0_22, %c0_23], %28 {strides = array<i32>} : memref<1x32x128xf32, #tpu.memory_space<vmem>>, vector<1x32x128xf32>,
    return
  }
  func.func @transform_0(%arg0: i32, %arg1: i32) -> (i32, i32, i32) {
    %c0_i32 = arith.constant 0 : i32
    %c0_i32_0 = arith.constant 0 : i32
    return %arg0, %c0_i32, %arg1 : i32, i32, i32
  }
  func.func @transform_1(%arg0: i32, %arg1: i32) -> (i32, i32) {
    %c0_i32 = arith.constant 0 : i32
    %c0_i32_0 = arith.constant 0 : i32
    %c0_i32_1 = arith.constant 0 : i32
    return %c0_i32, %c0_i32_0 : i32, i32
  }
  func.func @transform_2(%arg0: i32, %arg1: i32) -> (i32, i32) {
    %c0_i32 = arith.constant 0 : i32
    %c0_i32_0 = arith.constant 0 : i32
    %c0_i32_1 = arith.constant 0 : i32
    return %c0_i32, %c0_i32_0 : i32, i32
  }
  func.func @transform_3(%arg0: i32, %arg1: i32) -> (i32, i32) {
    %c0_i32 = arith.constant 0 : i32
    %c0_i32_0 = arith.constant 0 : i32
    %c0_i32_1 = arith.constant 0 : i32
    return %c0_i32, %c0_i32_0 : i32, i32
  }
  func.func @transform_4(%arg0: i32, %arg1: i32) -> (i32, i32) {
    %c0_i32 = arith.constant 0 : i32
    %c0_i32_0 = arith.constant 0 : i32
    %c0_i32_1 = arith.constant 0 : i32
    return %c0_i32, %c0_i32_0 : i32, i32
  }
  func.func @transform_5(%arg0: i32, %arg1: i32) -> (i32, i32) {
    %c0_i32 = arith.constant 0 : i32
    %c0_i32_0 = arith.constant 0 : i32
    %c0_i32_1 = arith.constant 0 : i32
    return %c0_i32, %c0_i32_0 : i32, i32
  }
  func.func @transform_6(%arg0: i32, %arg1: i32) -> (i32, i32) {
    %c0_i32 = arith.constant 0 : i32
    %c0_i32_0 = arith.constant 0 : i32
    %c0_i32_1 = arith.constant 0 : i32
    return %c0_i32, %c0_i32_0 : i32, i32
  }
  func.func @transform_7(%arg0: i32, %arg1: i32) -> (i32, i32, i32) {
    %c0_i32 = arith.constant 0 : i32
    %c0_i32_0 = arith.constant 0 : i32
    return %arg0, %c0_i32, %arg1 : i32, i32, i32
  }
  func.func @transform_8(%arg0: i32, %arg1: i32) -> (i32, i32, i32) {
    %c0_i32 = arith.constant 0 : i32
    %c0_i32_0 = arith.constant 0 : i32
    return %arg0, %c0_i32, %arg1 : i32, i32, i32
  }
}

</mosaic_0001>

<llo_original>
// kernel: tpu_custom_call.1
$region0: #{tpu_custom_call.1}
  #allocation0 [shape = 'u32[]', space=smem, size = 0x4, offset = 0x4, fixed_abs, tag = 'smem constant byte address 0x4 - core index']
  #allocation1 [shape = 'u32[144,128]{1,0:T(1,128)}', space=vmem, size = 0x12000, scoped, tag = 'internal scratch']
  %s0 = inlined_call_operand.vmem [shape: f32[2,48,128], index: 0, kind: input, shape index: {}]
  %s1 = inlined_call_operand.vmem [shape: f32[32,48], index: 1, kind: input, shape index: {}]
  %s2 = inlined_call_operand.vmem [shape: f32[32,1], index: 2, kind: input, shape index: {}]
  %s3 = inlined_call_operand.vmem [shape: f32[32,32], index: 3, kind: input, shape index: {}]
  %s4 = inlined_call_operand.vmem [shape: f32[32,1], index: 4, kind: input, shape index: {}]
  %s5 = inlined_call_operand.vmem [shape: f32[64,32], index: 5, kind: input, shape index: {}]
  %s6 = inlined_call_operand.vmem [shape: f32[64,1], index: 6, kind: input, shape index: {}]
  %s7 = inlined_call_operand.hbm [shape: f32[2,32,128], index: 7, kind: output, shape index: {0}]
  %s8 = inlined_call_operand.hbm [shape: f32[2,32,128], index: 8, kind: output, shape index: {1}]
  %9 = xla_tuple %s7, %s8
  %s10 = sld [smem:[#allocation0]]
  $region69: #{tpu_custom_call.1} parent=0
    _
  %s12 = ssub.s32 1, %s10
  %s13 = scalar_select 0, %s12, %s10
  $region1: #{tpu_custom_call.1} parent=0
    #allocation2 [shape = 'u8[32768]{0}', space=vmem, size = 0x8000, scoped, tag = 'output window, operand 0']
    #allocation3 [shape = 's32[2]{0}', space=sflag, size = 0x8, scoped, tag = 'scoped memory for tpu_custom_call.1']
    #allocation4 [shape = 'u8[32768]{0}', space=vmem, size = 0x8000, scoped, tag = 'output window, operand 1']
    #allocation5 [shape = 's32[2]{0}', space=sflag, size = 0x8, scoped, tag = 'scoped memory for tpu_custom_call.1']
    %14 = vsyncpa [#allocation3], 0
    %s15 = scalar_lea.sflag [#allocation3], 1
    %16 = vsyncpa %s15, 0
    %17 = vsyncpa [#allocation5], 0
    %s18 = scalar_lea.sflag [#allocation5], 1
    %19 = vsyncpa %s18, 0
    loop: start=0, step=1, limit=4
    $region2: #{tpu_custom_call.1} parent=1 // loop_pre_header
      _
    $region3: #{tpu_custom_call.1} parent=1 // loop_header
      %s21 = sphi 0, %s25
      %p22 = scmp.ge.s32.totalorder %s21, 4
      %s28 = sphi 0, %s40
      %s29 = sphi 0, %s36
      %s30 = sphi 0, %s28
      %s31 = sphi 0, %s29
      %s32 = sphi 0, %s30
      %s33 = sphi 0, %s31
      %s45 = sphi 0, %s47
      %s48 = sphi 0, %s45
      %s49 = sphi 0, %s48
      %s65 = sphi 0, %s49
      %s69 = sphi 0, %s69
      %s71 = sphi 0, %s69
      %s72 = sphi 0, %s71
      %s86 = sphi 0, %s72
      %s90 = sphi 0, %s90
      %s92 = sphi 0, %s90
      %s93 = sphi 0, %s92
      %s107 = sphi 0, %s93
      %s111 = sphi 0, %s111
      %s113 = sphi 0, %s111
      %s114 = sphi 0, %s113
      %s128 = sphi 0, %s114
      %s132 = sphi 0, %s132
      %s134 = sphi 0, %s132
      %s135 = sphi 0, %s134
      %s149 = sphi 0, %s135
      %s153 = sphi 0, %s153
      %s155 = sphi 0, %s153
      %s156 = sphi 0, %s155
      %s170 = sphi 0, %s156
      %s174 = sphi 0, %s174
      %s176 = sphi 0, %s174
      %s177 = sphi 0, %s176
      %s191 = sphi 0, %s177
      %s199 = sphi 0, %s201
      %s202 = sphi 0, %s199
      %s203 = sphi 0, %s202
      %s219 = sphi 0, %s203
      %s227 = sphi 0, %s229
      %s230 = sphi 0, %s227
      %s231 = sphi 0, %s230
      %s247 = sphi 0, %s231
    $region4: #{tpu_custom_call.1} parent=1 // loop_header_branch
      %24 = sbr.rel (%p22) target = $region8
    $region5: #{tpu_custom_call.1} parent=1 // loop_body
      %s26 = ssub.s32 %s21, 1
      %s27 = ssub.s32 %s21, 2
      %s34 = sadd.s32 1, %s29
      %p35 = scmp.ge.s32.totalorder %s34, 1
      %s36 = scalar_select %p35, 0, %s34
      %s37 = sadd.s32 1, %s28
      %s38 = scalar_select %p35, %s37, %s28
      %p39 = scmp.ge.s32.totalorder %s38, 2
      %s40 = scalar_select %p39, 0, %s38
      %s41 = ssub.s32 %s28, %s40
      %s42 = ssub.s32 %s29, %s36
      %s43 = sor.u32 %s41, %s42
      %p44 = scmp.eq.s32.totalorder %s43, 0
      %s46 = sadd.s32 %s45, 1
      %s47 = scalar_select %p44, %s45, %s46
      %p50 = pneg %p44
      %p51 = scmp.eq.s32.totalorder %s21, 1
      %p52 = por %p50, %p51
      %p53 = scmp.ne.s32.totalorder %s45, %s48
      %p54 = scmp.eq.s32.totalorder %s21, 0
      %p55 = por %p53, %p54
      %p56 = scmp.ne.s32.totalorder %s45, %s48
      %p57 = scmp.eq.s32.totalorder %s26, 1
      %p58 = por %p56, %p57
      %p59 = scmp.ne.s32.totalorder %s48, %s49
      %p60 = scmp.eq.s32.totalorder %s26, 0
      %p61 = por %p59, %p60
      %p62 = scmp.ne.s32.totalorder %s48, %s49
      %p63 = scmp.eq.s32.totalorder %s27, 1
      %p64 = por %p62, %p63
      %p66 = scmp.ne.s32.totalorder %s49, %s65
      %p67 = scmp.eq.s32.totalorder %s27, 0
      %p68 = por %p66, %p67
      %s70 = sadd.s32 %s69, 1
      %p73 = scmp.eq.s32.totalorder %s21, 1
      %p74 = scmp.ne.s32.totalorder %s69, %s71
      %p75 = scmp.eq.s32.totalorder %s21, 0
      %p76 = por %p74, %p75
      %p77 = scmp.ne.s32.totalorder %s69, %s71
      %p78 = scmp.eq.s32.totalorder %s26, 1
      %p79 = por %p77, %p78
      %p80 = scmp.ne.s32.totalorder %s71, %s72
      %p81 = scmp.eq.s32.totalorder %s26, 0
      %p82 = por %p80, %p81
      %p83 = scmp.ne.s32.totalorder %s71, %s72
      %p84 = scmp.eq.s32.totalorder %s27, 1
      %p85 = por %p83, %p84
      %p87 = scmp.ne.s32.totalorder %s72, %s86
      %p88 = scmp.eq.s32.totalorder %s27, 0
      %p89 = por %p87, %p88
      %s91 = sadd.s32 %s90, 1
      %p94 = scmp.eq.s32.totalorder %s21, 1
      %p95 = scmp.ne.s32.totalorder %s90, %s92
      %p96 = scmp.eq.s32.totalorder %s21, 0
      %p97 = por %p95, %p96
      %p98 = scmp.ne.s32.totalorder %s90, %s92
      %p99 = scmp.eq.s32.totalorder %s26, 1
      %p100 = por %p98, %p99
      %p101 = scmp.ne.s32.totalorder %s92, %s93
      %p102 = scmp.eq.s32.totalorder %s26, 0
      %p103 = por %p101, %p102
      %p104 = scmp.ne.s32.totalorder %s92, %s93
      %p105 = scmp.eq.s32.totalorder %s27, 1
      %p106 = por %p104, %p105
      %p108 = scmp.ne.s32.totalorder %s93, %s107
      %p109 = scmp.eq.s32.totalorder %s27, 0
      %p110 = por %p108, %p109
      %s112 = sadd.s32 %s111, 1
      %p115 = scmp.eq.s32.totalorder %s21, 1
      %p116 = scmp.ne.s32.totalorder %s111, %s113
      %p117 = scmp.eq.s32.totalorder %s21, 0
      %p118 = por %p116, %p117
      %p119 = scmp.ne.s32.totalorder %s111, %s113
      %p120 = scmp.eq.s32.totalorder %s26, 1
      %p121 = por %p119, %p120
      %p122 = scmp.ne.s32.totalorder %s113, %s114
      %p123 = scmp.eq.s32.totalorder %s26, 0
      %p124 = por %p122, %p123
      %p125 = scmp.ne.s32.totalorder %s113, %s114
      %p126 = scmp.eq.s32.totalorder %s27, 1
      %p127 = por %p125, %p126
      %p129 = scmp.ne.s32.totalorder %s114, %s128
      %p130 = scmp.eq.s32.totalorder %s27, 0
      %p131 = por %p129, %p130
      %s133 = sadd.s32 %s132, 1
      %p136 = scmp.eq.s32.totalorder %s21, 1
      %p137 = scmp.ne.s32.totalorder %s132, %s134
      %p138 = scmp.eq.s32.totalorder %s21, 0
      %p139 = por %p137, %p138
      %p140 = scmp.ne.s32.totalorder %s132, %s134
      %p141 = scmp.eq.s32.totalorder %s26, 1
      %p142 = por %p140, %p141
      %p143 = scmp.ne.s32.totalorder %s134, %s135
      %p144 = scmp.eq.s32.totalorder %s26, 0
      %p145 = por %p143, %p144
      %p146 = scmp.ne.s32.totalorder %s134, %s135
      %p147 = scmp.eq.s32.totalorder %s27, 1
      %p148 = por %p146, %p147
      %p150 = scmp.ne.s32.totalorder %s135, %s149
      %p151 = scmp.eq.s32.totalorder %s27, 0
      %p152 = por %p150, %p151
      %s154 = sadd.s32 %s153, 1
      %p157 = scmp.eq.s32.totalorder %s21, 1
      %p158 = scmp.ne.s32.totalorder %s153, %s155
      %p159 = scmp.eq.s32.totalorder %s21, 0
      %p160 = por %p158, %p159
      %p161 = scmp.ne.s32.totalorder %s153, %s155
      %p162 = scmp.eq.s32.totalorder %s26, 1
      %p163 = por %p161, %p162
      %p164 = scmp.ne.s32.totalorder %s155, %s156
      %p165 = scmp.eq.s32.totalorder %s26, 0
      %p166 = por %p164, %p165
      %p167 = scmp.ne.s32.totalorder %s155, %s156
      %p168 = scmp.eq.s32.totalorder %s27, 1
      %p169 = por %p167, %p168
      %p171 = scmp.ne.s32.totalorder %s156, %s170
      %p172 = scmp.eq.s32.totalorder %s27, 0
      %p173 = por %p171, %p172
      %s175 = sadd.s32 %s174, 1
      %p178 = scmp.eq.s32.totalorder %s21, 1
      %p179 = scmp.ne.s32.totalorder %s174, %s176
      %p180 = scmp.eq.s32.totalorder %s21, 0
      %p181 = por %p179, %p180
      %p182 = scmp.ne.s32.totalorder %s174, %s176
      %p183 = scmp.eq.s32.totalorder %s26, 1
      %p184 = por %p182, %p183
      %p185 = scmp.ne.s32.totalorder %s176, %s177
      %p186 = scmp.eq.s32.totalorder %s26, 0
      %p187 = por %p185, %p186
      %p188 = scmp.ne.s32.totalorder %s176, %s177
      %p189 = scmp.eq.s32.totalorder %s27, 1
      %p190 = por %p188, %p189
      %p192 = scmp.ne.s32.totalorder %s177, %s191
      %p193 = scmp.eq.s32.totalorder %s27, 0
      %p194 = por %p192, %p193
      %s195 = ssub.s32 %s28, %s40
      %s196 = ssub.s32 %s29, %s36
      %s197 = sor.u32 %s195, %s196
      %p198 = scmp.eq.s32.totalorder %s197, 0
      %s200 = sadd.s32 %s199, 1
      %s201 = scalar_select %p198, %s199, %s200
      %p204 = pneg %p198
      %p205 = scmp.eq.s32.totalorder %s21, 1
      %p206 = por %p204, %p205
      %p207 = scmp.ne.s32.totalorder %s199, %s202
      %p208 = scmp.eq.s32.totalorder %s21, 0
      %p209 = por %p207, %p208
      %p210 = scmp.ne.s32.totalorder %s199, %s202
      %p211 = scmp.eq.s32.totalorder %s26, 1
      %p212 = por %p210, %p211
      %p213 = scmp.ne.s32.totalorder %s202, %s203
      %p214 = scmp.eq.s32.totalorder %s26, 0
      %p215 = por %p213, %p214
      %p216 = scmp.ne.s32.totalorder %s202, %s203
      %p217 = scmp.eq.s32.totalorder %s27, 1
      %p218 = por %p216, %p217
      %p220 = scmp.ne.s32.totalorder %s203, %s219
      %p221 = scmp.eq.s32.totalorder %s27, 0
      %p222 = por %p220, %p221
      %s223 = ssub.s32 %s28, %s40
      %s224 = ssub.s32 %s29, %s36
      %s225 = sor.u32 %s223, %s224
      %p226 = scmp.eq.s32.totalorder %s225, 0
      %s228 = sadd.s32 %s227, 1
      %s229 = scalar_select %p226, %s227, %s228
      %p232 = pneg %p226
      %p233 = scmp.eq.s32.totalorder %s21, 1
      %p234 = por %p232, %p233
      %p235 = scmp.ne.s32.totalorder %s227, %s230
      %p236 = scmp.eq.s32.totalorder %s21, 0
      %p237 = por %p235, %p236
      %p238 = scmp.ne.s32.totalorder %s227, %s230
      %p239 = scmp.eq.s32.totalorder %s26, 1
      %p240 = por %p238, %p239
      %p241 = scmp.ne.s32.totalorder %s230, %s231
      %p242 = scmp.eq.s32.totalorder %s26, 0
      %p243 = por %p241, %p242
      %p244 = scmp.ne.s32.totalorder %s230, %s231
      %p245 = scmp.eq.s32.totalorder %s27, 1
      %p246 = por %p244, %p245
      %p248 = scmp.ne.s32.totalorder %s231, %s247
      %p249 = scmp.eq.s32.totalorder %s27, 0
      %p250 = por %p248, %p249
      %p251 = scmp.le.s32.totalorder 1, %s21
      %p252 = scmp.lt.s32.totalorder %s21, 3
      %p253 = pnand %p251, %p252
      %p254 = pneg %p253
      // Predicated region
      $region9: #{tpu_custom_call.1} parent=5 // pred_check
        _
      $region10: #{tpu_custom_call.1} parent=5 // pred_check_branch
        %256 = sbr.rel (%p253) target = $region12
      $region11: #{tpu_custom_call.1} parent=5 // pred_region
        %s257 = ssub.s32 %s21, 1
        // Predicated region
        $region13: #{tpu_custom_call.1} parent=11 // pred_check
          %p258 = pneg %p82
        $region14: #{tpu_custom_call.1} parent=11 // pred_check_branch
          %260 = sbr.rel (%p258) target = $region16
        $region15: #{tpu_custom_call.1} parent=11 // pred_region
          _
        $region16: #{tpu_custom_call.1} parent=11 // pred_fallthru
          _
        // Predicated region
        $region17: #{tpu_custom_call.1} parent=11 // pred_check
          %p261 = pneg %p103
        $region18: #{tpu_custom_call.1} parent=11 // pred_check_branch
          %263 = sbr.rel (%p261) target = $region20
        $region19: #{tpu_custom_call.1} parent=11 // pred_region
          _
        $region20: #{tpu_custom_call.1} parent=11 // pred_fallthru
          _
        // Predicated region
        $region21: #{tpu_custom_call.1} parent=11 // pred_check
          %p264 = pneg %p124
        $region22: #{tpu_custom_call.1} parent=11 // pred_check_branch
          %266 = sbr.rel (%p264) target = $region24
        $region23: #{tpu_custom_call.1} parent=11 // pred_region
          _
        $region24: #{tpu_custom_call.1} parent=11 // pred_fallthru
          _
        // Predicated region
        $region25: #{tpu_custom_call.1} parent=11 // pred_check
          %p267 = pneg %p145
        $region26: #{tpu_custom_call.1} parent=11 // pred_check_branch
          %269 = sbr.rel (%p267) target = $region28
        $region27: #{tpu_custom_call.1} parent=11 // pred_region
          _
        $region28: #{tpu_custom_call.1} parent=11 // pred_fallthru
          _
        // Predicated region
        $region29: #{tpu_custom_call.1} parent=11 // pred_check
          %p270 = pneg %p166
        $region30: #{tpu_custom_call.1} parent=11 // pred_check_branch
          %272 = sbr.rel (%p270) target = $region32
        $region31: #{tpu_custom_call.1} parent=11 // pred_region
          _
        $region32: #{tpu_custom_call.1} parent=11 // pred_fallthru
          _
        // Predicated region
        $region33: #{tpu_custom_call.1} parent=11 // pred_check
          %p273 = pneg %p187
        $region34: #{tpu_custom_call.1} parent=11 // pred_check_branch
          %275 = sbr.rel (%p273) target = $region36
        $region35: #{tpu_custom_call.1} parent=11 // pred_region
          _
        $region36: #{tpu_custom_call.1} parent=11 // pred_fallthru
          _
      $region12: #{tpu_custom_call.1} parent=5 // pred_fallthru
        _
      %p276 = scmp.lt.s32.totalorder %s21, 2
      // Predicated region
      $region37: #{tpu_custom_call.1} parent=5 // pred_check
        %p277 = pneg %p276
      $region38: #{tpu_custom_call.1} parent=5 // pred_check_branch
        %279 = sbr.rel (%p277) target = $region40
      $region39: #{tpu_custom_call.1} parent=5 // pred_region
        // Predicated region
        $region41: #{tpu_custom_call.1} parent=39 // pred_check
          %p280 = pneg %p55
        $region42: #{tpu_custom_call.1} parent=39 // pred_check_branch
          %282 = sbr.rel (%p280) target = $region44
        $region43: #{tpu_custom_call.1} parent=39 // pred_region
          %p283 = scmp.lt.s32.totalorder %s28, 1
          %s284 = scalar_select %p283, %s28, 1
          %p285 = scmp.lt.s32.totalorder %s29, 0
          %s286 = scalar_select %p285, %s29, 0
          %s287 = smul.addr %s284, 6
          %s288 = sadd.s32 %s286, %s287
          %s289 = smul.addr %s288, 8
          %s290 = scalar_lea.vmem %s0, %s289
        $region44: #{tpu_custom_call.1} parent=39 // pred_fallthru
          _
      $region40: #{tpu_custom_call.1} parent=5 // pred_fallthru
        _
      %p291 = scmp.le.s32.totalorder 1, %s21
      %p292 = scmp.lt.s32.totalorder %s21, 3
      %p293 = pnand %p291, %p292
      %p294 = pneg %p293
      // Predicated region
      $region45: #{tpu_custom_call.1} parent=5 // pred_check
        _
      $region46: #{tpu_custom_call.1} parent=5 // pred_check_branch
        %296 = sbr.rel (%p293) target = $region48
      $region47: #{tpu_custom_call.1} parent=5 // pred_region
        %s297 = ssub.s32 %s21, 1
        %p298 = scmp.lt.s32.totalorder %s30, 1
        %s299 = scalar_select %p298, %s30, 1
        %p300 = scmp.lt.s32.totalorder %s31, 0
        %s301 = scalar_select %p300, %s31, 0
        %s302 = smul.addr %s299, 6
        %s303 = sadd.s32 %s301, %s302
        %s304 = smul.addr %s303, 8
        %s305 = scalar_lea.vmem %s0, %s304
        %p306 = pneg %p61
        %p307 = pneg %p58
        %p308 = pneg %p82
        %p309 = pneg %p79
        %p310 = pneg %p103
        %p311 = pneg %p100
        %p312 = pneg %p124
        %p313 = pneg %p121
        %p314 = pneg %p145
        %p315 = pneg %p142
        %p316 = pneg %p166
        %p317 = pneg %p163
        %p318 = pneg %p187
        %p319 = pneg %p184
        %p320 = pneg %p215
        %p321 = pneg %p212
        %s322 = sand.u32 %s202, 1
        %s323 = scalar_lea.sflag [#allocation3], %s322
        %s324 = sand.u32 %s202, 1
        %s325 = smul.addr %s324, 32
        %s326 = scalar_lea.vmem [#allocation2], %s325
        %p327 = pneg %p243
        %p328 = pneg %p240
        %s329 = sand.u32 %s230, 1
        %s330 = scalar_lea.sflag [#allocation5], %s329
        %s331 = sand.u32 %s230, 1
        %s332 = smul.addr %s331, 32
        %s333 = scalar_lea.vmem [#allocation4], %s332
        %p334 = scmp.lt.s32.totalorder %s30, 1
        %s335 = scalar_select %p334, %s30, 1
        %p336 = scmp.lt.s32.totalorder %s31, 0
        %s337 = scalar_select %p336, %s31, 0
        %s338 = smul.addr %s335, 6
        %s339 = sadd.s32 %s337, %s338
        %s340 = smul.addr %s339, 8
        %s341 = scalar_lea.vmem %s0, %s340
        %v342 = vld [vmem:[%s1] sm:$0xff]
        %v343 = vld [vmem:[%s1 + $0x8] sm:$0xff]
        %v344 = vld [vmem:[%s1 + $0x10] sm:$0xff]
        %v345 = vld [vmem:[%s1 + $0x18] sm:$0xff]
        %v346 = vld [vmem:[%s341] sm:$0xff]
        %v347 = vld [vmem:[%s341 + $0x8] sm:$0xff]
        %v348 = vld [vmem:[%s341 + $0x10] sm:$0xff]
        %v349 = vld [vmem:[%s341 + $0x18] sm:$0xff]
        %v350 = vld [vmem:[%s341 + $0x20] sm:$0xff]
        %v351 = vld [vmem:[%s341 + $0x28] sm:$0xff]
        %v352 = vld [vmem:[%s2] sm:$0xff]
        %v353 = vld [vmem:[%s2 + $0x8] sm:$0xff]
        %v354 = vld [vmem:[%s2 + $0x10] sm:$0xff]
        %v355 = vld [vmem:[%s2 + $0x18] sm:$0xff]
        %357 = vset.pattern.permute.xlu0 0
        %358 = vperm.xlu0 %357, %v352
        %v359 = vpop.permute.xlu0 %358
        %362 = vset.pattern.permute.xlu0 0
        %363 = vperm.xlu0 %362, %v353
        %v364 = vpop.permute.xlu0 %363
        %367 = vset.pattern.permute.xlu0 0
        %368 = vperm.xlu0 %367, %v354
        %v369 = vpop.permute.xlu0 %368
        %372 = vset.pattern.permute.xlu0 0
        %373 = vperm.xlu0 %372, %v355
        %v374 = vpop.permute.xlu0 %373
        %vm376 = vcmask 392192
        %v378 = vsel %vm376, %v342, 0
        %v381 = vsel %vm376, %v343, 0
        %v384 = vsel %vm376, %v344, 0
        %v387 = vsel %vm376, %v345, 0
        %389 = vmatprep.subr.mxu0 0.0
        %390 = vmatpush1.msra.mxu0 %v346
        %391 = vmatprep.subr.mxu0 0.0
        %392 = vmatpush1.msra.mxu0 %v347
        %393 = vmatprep.subr.mxu0 0.0
        %394 = vmatpush1.msra.mxu0 %v348
        %395 = vmatprep.subr.mxu0 0.0
        %396 = vmatpush1.msra.mxu0 %v349
        %397 = vmatprep.subr.mxu0 0.0
        %398 = vmatpush1.msra.mxu0 %v350
        %399 = vmatprep.subr.mxu0 0.0
        %400 = vmatpush1.msra.mxu0 %v351
        %401 = vmatprep.subr.mxu0 0.0
        %402 = vmatpush1.msra.mxu0 0.0
        %403 = vmatprep.subr.mxu0 0.0
        %404 = vmatpush1.msra.mxu0 0.0
        %405 = vmatprep.subr.mxu0 0.0
        %406 = vmatpush1.msra.mxu0 0.0
        %407 = vmatprep.subr.mxu0 0.0
        %408 = vmatpush1.msra.mxu0 0.0
        %409 = vmatprep.subr.mxu0 0.0
        %410 = vmatpush1.msra.mxu0 0.0
        %411 = vmatprep.subr.mxu0 0.0
        %412 = vmatpush1.msra.mxu0 0.0
        %413 = vmatprep.subr.mxu0 0.0
        %414 = vmatpush1.msra.mxu0 0.0
        %415 = vmatprep.subr.mxu0 0.0
        %416 = vmatpush1.msra.mxu0 0.0
        %417 = vmatprep.subr.mxu0 0.0
        %418 = vmatpush1.msra.mxu0 0.0
        %419 = vmatprep.subr.mxu0 0.0
        %420 = vmatpush1.msra.mxu0 0.0
        %421 = vmatprep.subr.mxu0 0.0
        %422 = vmatpush1.msra.mxu0 0.0
        %423 = vmatprep.subr.mxu0 0.0
        %424 = vmatpush1.msra.mxu0 0.0
        %425 = vmatprep.subr.mxu0 0.0
        %426 = vmatpush1.msra.mxu0 0.0
        %427 = vmatprep.subr.mxu0 0.0
        %428 = vmatpush1.msra.mxu0 0.0
        %429 = vmatprep.subr.mxu0 0.0
        %430 = vmatpush1.msra.mxu0 0.0
        %431 = vmatprep.subr.mxu0 0.0
        %432 = vmatpush1.msra.mxu0 0.0
        %433 = vmatprep.subr.mxu0 0.0
        %434 = vmatpush1.msra.mxu0 0.0
        %435 = vmatprep.subr.mxu0 0.0
        %436 = vmatpush1.msra.mxu0 0.0
        %437 = vmatprep.subr.mxu0 0.0
        %438 = vmatpush1.msra.mxu0 0.0
        %439 = vmatprep.subr.mxu0 0.0
        %440 = vmatpush1.msra.mxu0 0.0
        %441 = vmatprep.subr.mxu0 0.0
        %442 = vmatpush1.msra.mxu0 0.0
        %443 = vmatprep.subr.mxu0 0.0
        %444 = vmatpush1.msra.mxu0 0.0
        %445 = vmatprep.subr.mxu0 0.0
        %446 = vmatpush1.msra.mxu0 0.0
        %447 = vmatprep.subr.mxu0 0.0
        %448 = vmatpush1.msra.mxu0 0.0
        %449 = vmatprep.subr.mxu0 0.0
        %450 = vmatpush1.msra.mxu0 0.0
        %451 = vmatprep.subr.mxu0 0.0
        %452 = vmatpush1.msra.mxu0 0.0
        %453 = vmatprep.mubr.f32.mxu0 0.0
        %454 = vmatmul.mubr.f32.gmra.mrb[0].mxu0 %v378
        %v455 = vpop.f32.mrb[0].mxu0
        %v456 = vadd.f32 %v359, %v455
        %v457 = vpop.f32.mrb[0].mxu0
        %458 = vmatprep.mubr.f32.mxu0 0.0
        %459 = vmatmul.mubr.f32.gmra.mrb[0].mxu0 %v381
        %v460 = vpop.f32.mrb[0].mxu0
        %v461 = vadd.f32 %v364, %v460
        %v462 = vpop.f32.mrb[0].mxu0
        %463 = vmatprep.mubr.f32.mxu0 0.0
        %464 = vmatmul.mubr.f32.gmra.mrb[0].mxu0 %v384
        %v465 = vpop.f32.mrb[0].mxu0
        %v466 = vadd.f32 %v369, %v465
        %v467 = vpop.f32.mrb[0].mxu0
        %468 = vmatprep.mubr.f32.mxu0 0.0
        %469 = vmatmul.mubr.f32.gmra.mrb[0].mxu0 %v387
        %v470 = vpop.f32.mrb[0].mxu0
        %v471 = vadd.f32 %v374, %v470
        %v472 = vpop.f32.mrb[0].mxu0
        %473 = vdwg.mxu0
        %v474 = vld [vmem:[%s3] sm:$0xff]
        %v475 = vld [vmem:[%s3 + $0x8] sm:$0xff]
        %v476 = vld [vmem:[%s3 + $0x10] sm:$0xff]
        %v477 = vld [vmem:[%s3 + $0x18] sm:$0xff]
        %v478 = vld [vmem:[%s4] sm:$0xff]
        %v479 = vld [vmem:[%s4 + $0x8] sm:$0xff]
        %v480 = vld [vmem:[%s4 + $0x10] sm:$0xff]
        %v481 = vld [vmem:[%s4 + $0x18] sm:$0xff]
        %483 = vset.pattern.permute.xlu0 0
        %484 = vperm.xlu0 %483, %v478
        %v485 = vpop.permute.xlu0 %484
        %488 = vset.pattern.permute.xlu0 0
        %489 = vperm.xlu0 %488, %v479
        %v490 = vpop.permute.xlu0 %489
        %493 = vset.pattern.permute.xlu0 0
        %494 = vperm.xlu0 %493, %v480
        %v495 = vpop.permute.xlu0 %494
        %498 = vset.pattern.permute.xlu0 0
        %499 = vperm.xlu0 %498, %v481
        %v500 = vpop.permute.xlu0 %499
        %vm502 = vcmask 261120
        %v504 = vsel %vm502, %v474, 0
        %v507 = vsel %vm502, %v475, 0
        %v510 = vsel %vm502, %v476, 0
        %v513 = vsel %vm502, %v477, 0
        %515 = vmatprep.subr.mxu0 0.0
        %516 = vmatpush1.msra.mxu0 %v456
        %517 = vmatprep.subr.mxu0 0.0
        %518 = vmatpush1.msra.mxu0 %v461
        %519 = vmatprep.subr.mxu0 0.0
        %520 = vmatpush1.msra.mxu0 %v466
        %521 = vmatprep.subr.mxu0 0.0
        %522 = vmatpush1.msra.mxu0 %v471
        %523 = vmatprep.subr.mxu0 0.0
        %524 = vmatpush1.msra.mxu0 0.0
        %525 = vmatprep.subr.mxu0 0.0
        %526 = vmatpush1.msra.mxu0 0.0
        %527 = vmatprep.subr.mxu0 0.0
        %528 = vmatpush1.msra.mxu0 0.0
        %529 = vmatprep.subr.mxu0 0.0
        %530 = vmatpush1.msra.mxu0 0.0
        %531 = vmatprep.subr.mxu0 0.0
        %532 = vmatpush1.msra.mxu0 0.0
        %533 = vmatprep.subr.mxu0 0.0
        %534 = vmatpush1.msra.mxu0 0.0
        %535 = vmatprep.subr.mxu0 0.0
        %536 = vmatpush1.msra.mxu0 0.0
        %537 = vmatprep.subr.mxu0 0.0
        %538 = vmatpush1.msra.mxu0 0.0
        %539 = vmatprep.subr.mxu0 0.0
        %540 = vmatpush1.msra.mxu0 0.0
        %541 = vmatprep.subr.mxu0 0.0
        %542 = vmatpush1.msra.mxu0 0.0
        %543 = vmatprep.subr.mxu0 0.0
        %544 = vmatpush1.msra.mxu0 0.0
        %545 = vmatprep.subr.mxu0 0.0
        %546 = vmatpush1.msra.mxu0 0.0
        %547 = vmatprep.subr.mxu0 0.0
        %548 = vmatpush1.msra.mxu0 0.0
        %549 = vmatprep.subr.mxu0 0.0
        %550 = vmatpush1.msra.mxu0 0.0
        %551 = vmatprep.subr.mxu0 0.0
        %552 = vmatpush1.msra.mxu0 0.0
        %553 = vmatprep.subr.mxu0 0.0
        %554 = vmatpush1.msra.mxu0 0.0
        %555 = vmatprep.subr.mxu0 0.0
        %556 = vmatpush1.msra.mxu0 0.0
        %557 = vmatprep.subr.mxu0 0.0
        %558 = vmatpush1.msra.mxu0 0.0
        %559 = vmatprep.subr.mxu0 0.0
        %560 = vmatpush1.msra.mxu0 0.0
        %561 = vmatprep.subr.mxu0 0.0
        %562 = vmatpush1.msra.mxu0 0.0
        %563 = vmatprep.subr.mxu0 0.0
        %564 = vmatpush1.msra.mxu0 0.0
        %565 = vmatprep.subr.mxu0 0.0
        %566 = vmatpush1.msra.mxu0 0.0
        %567 = vmatprep.subr.mxu0 0.0
        %568 = vmatpush1.msra.mxu0 0.0
        %569 = vmatprep.subr.mxu0 0.0
        %570 = vmatpush1.msra.mxu0 0.0
        %571 = vmatprep.subr.mxu0 0.0
        %572 = vmatpush1.msra.mxu0 0.0
        %573 = vmatprep.subr.mxu0 0.0
        %574 = vmatpush1.msra.mxu0 0.0
        %575 = vmatprep.subr.mxu0 0.0
        %576 = vmatpush1.msra.mxu0 0.0
        %577 = vmatprep.subr.mxu0 0.0
        %578 = vmatpush1.msra.mxu0 0.0
        %579 = vmatprep.mubr.f32.mxu0 0.0
        %580 = vmatmul.mubr.f32.gmra.mrb[0].mxu0 %v504
        %v581 = vpop.f32.mrb[0].mxu0
        %v582 = vadd.f32 %v485, %v581
        %v583 = vpop.f32.mrb[0].mxu0
        %584 = vmatprep.mubr.f32.mxu0 0.0
        %585 = vmatmul.mubr.f32.gmra.mrb[0].mxu0 %v507
        %v586 = vpop.f32.mrb[0].mxu0
        %v587 = vadd.f32 %v490, %v586
        %v588 = vpop.f32.mrb[0].mxu0
        %589 = vmatprep.mubr.f32.mxu0 0.0
        %590 = vmatmul.mubr.f32.gmra.mrb[0].mxu0 %v510
        %v591 = vpop.f32.mrb[0].mxu0
        %v592 = vadd.f32 %v495, %v591
        %v593 = vpop.f32.mrb[0].mxu0
        %594 = vmatprep.mubr.f32.mxu0 0.0
        %595 = vmatmul.mubr.f32.gmra.mrb[0].mxu0 %v513
        %v596 = vpop.f32.mrb[0].mxu0
        %v597 = vadd.f32 %v500, %v596
        %v598 = vpop.f32.mrb[0].mxu0
        %599 = vdwg.mxu0
        %v600 = vmax.f32 %v582, 0.0
        %v601 = vmax.f32 %v587, 0.0
        %v602 = vmax.f32 %v592, 0.0
        %v603 = vmax.f32 %v597, 0.0
        %v604 = vld [vmem:[%s5] sm:$0xff]
        %v605 = vld [vmem:[%s5 + $0x8] sm:$0xff]
        %v606 = vld [vmem:[%s5 + $0x10] sm:$0xff]
        %v607 = vld [vmem:[%s5 + $0x18] sm:$0xff]
        %v608 = vld [vmem:[%s5 + $0x20] sm:$0xff]
        %v609 = vld [vmem:[%s5 + $0x28] sm:$0xff]
        %v610 = vld [vmem:[%s5 + $0x30] sm:$0xff]
        %v611 = vld [vmem:[%s5 + $0x38] sm:$0xff]
        %v612 = vld [vmem:[%s6] sm:$0xff]
        %v613 = vld [vmem:[%s6 + $0x8] sm:$0xff]
        %v614 = vld [vmem:[%s6 + $0x10] sm:$0xff]
        %v615 = vld [vmem:[%s6 + $0x18] sm:$0xff]
        %v616 = vld [vmem:[%s6 + $0x20] sm:$0xff]
        %v617 = vld [vmem:[%s6 + $0x28] sm:$0xff]
        %v618 = vld [vmem:[%s6 + $0x30] sm:$0xff]
        %v619 = vld [vmem:[%s6 + $0x38] sm:$0xff]
        %621 = vset.pattern.permute.xlu0 0
        %622 = vperm.xlu0 %621, %v612
        %v623 = vpop.permute.xlu0 %622
        %626 = vset.pattern.permute.xlu0 0
        %627 = vperm.xlu0 %626, %v613
        %v628 = vpop.permute.xlu0 %627
        %631 = vset.pattern.permute.xlu0 0
        %632 = vperm.xlu0 %631, %v614
        %v633 = vpop.permute.xlu0 %632
        %636 = vset.pattern.permute.xlu0 0
        %637 = vperm.xlu0 %636, %v615
        %v638 = vpop.permute.xlu0 %637
        %641 = vset.pattern.permute.xlu0 0
        %642 = vperm.xlu0 %641, %v616
        %v643 = vpop.permute.xlu0 %642
        %646 = vset.pattern.permute.xlu0 0
        %647 = vperm.xlu0 %646, %v617
        %v648 = vpop.permute.xlu0 %647
        %651 = vset.pattern.permute.xlu0 0
        %652 = vperm.xlu0 %651, %v618
        %v653 = vpop.permute.xlu0 %652
        %656 = vset.pattern.permute.xlu0 0
        %657 = vperm.xlu0 %656, %v619
        %v658 = vpop.permute.xlu0 %657
        %v661 = vsel %vm502, %v604, 0
        %v664 = vsel %vm502, %v605, 0
        %v667 = vsel %vm502, %v606, 0
        %v670 = vsel %vm502, %v607, 0
        %v673 = vsel %vm502, %v608, 0
        %v676 = vsel %vm502, %v609, 0
        %v679 = vsel %vm502, %v610, 0
        %v682 = vsel %vm502, %v611, 0
        %684 = vmatprep.subr.mxu0 0.0
        %685 = vmatpush1.msra.mxu0 %v600
        %686 = vmatprep.subr.mxu0 0.0
        %687 = vmatpush1.msra.mxu0 %v601
        %688 = vmatprep.subr.mxu0 0.0
        %689 = vmatpush1.msra.mxu0 %v602
        %690 = vmatprep.subr.mxu0 0.0
        %691 = vmatpush1.msra.mxu0 %v603
        %692 = vmatprep.subr.mxu0 0.0
        %693 = vmatpush1.msra.mxu0 0.0
        %694 = vmatprep.subr.mxu0 0.0
        %695 = vmatpush1.msra.mxu0 0.0
        %696 = vmatprep.subr.mxu0 0.0
        %697 = vmatpush1.msra.mxu0 0.0
        %698 = vmatprep.subr.mxu0 0.0
        %699 = vmatpush1.msra.mxu0 0.0
        %700 = vmatprep.subr.mxu0 0.0
        %701 = vmatpush1.msra.mxu0 0.0
        %702 = vmatprep.subr.mxu0 0.0
        %703 = vmatpush1.msra.mxu0 0.0
        %704 = vmatprep.subr.mxu0 0.0
        %705 = vmatpush1.msra.mxu0 0.0
        %706 = vmatprep.subr.mxu0 0.0
        %707 = vmatpush1.msra.mxu0 0.0
        %708 = vmatprep.subr.mxu0 0.0
        %709 = vmatpush1.msra.mxu0 0.0
        %710 = vmatprep.subr.mxu0 0.0
        %711 = vmatpush1.msra.mxu0 0.0
        %712 = vmatprep.subr.mxu0 0.0
        %713 = vmatpush1.msra.mxu0 0.0
        %714 = vmatprep.subr.mxu0 0.0
        %715 = vmatpush1.msra.mxu0 0.0
        %716 = vmatprep.subr.mxu0 0.0
        %717 = vmatpush1.msra.mxu0 0.0
        %718 = vmatprep.subr.mxu0 0.0
        %719 = vmatpush1.msra.mxu0 0.0
        %720 = vmatprep.subr.mxu0 0.0
        %721 = vmatpush1.msra.mxu0 0.0
        %722 = vmatprep.subr.mxu0 0.0
        %723 = vmatpush1.msra.mxu0 0.0
        %724 = vmatprep.subr.mxu0 0.0
        %725 = vmatpush1.msra.mxu0 0.0
        %726 = vmatprep.subr.mxu0 0.0
        %727 = vmatpush1.msra.mxu0 0.0
        %728 = vmatprep.subr.mxu0 0.0
        %729 = vmatpush1.msra.mxu0 0.0
        %730 = vmatprep.subr.mxu0 0.0
        %731 = vmatpush1.msra.mxu0 0.0
        %732 = vmatprep.subr.mxu0 0.0
        %733 = vmatpush1.msra.mxu0 0.0
        %734 = vmatprep.subr.mxu0 0.0
        %735 = vmatpush1.msra.mxu0 0.0
        %736 = vmatprep.subr.mxu0 0.0
        %737 = vmatpush1.msra.mxu0 0.0
        %738 = vmatprep.subr.mxu0 0.0
        %739 = vmatpush1.msra.mxu0 0.0
        %740 = vmatprep.subr.mxu0 0.0
        %741 = vmatpush1.msra.mxu0 0.0
        %742 = vmatprep.subr.mxu0 0.0
        %743 = vmatpush1.msra.mxu0 0.0
        %744 = vmatprep.subr.mxu0 0.0
        %745 = vmatpush1.msra.mxu0 0.0
        %746 = vmatprep.subr.mxu0 0.0
        %747 = vmatpush1.msra.mxu0 0.0
        %748 = vmatprep.mubr.f32.mxu0 0.0
        %749 = vmatmul.mubr.f32.gmra.mrb[0].mxu0 %v661
        %v750 = vpop.f32.mrb[0].mxu0
        %v751 = vadd.f32 %v623, %v750
        %v752 = vpop.f32.mrb[0].mxu0
        %753 = vmatprep.mubr.f32.mxu0 0.0
        %754 = vmatmul.mubr.f32.gmra.mrb[0].mxu0 %v664
        %v755 = vpop.f32.mrb[0].mxu0
        %v756 = vadd.f32 %v628, %v755
        %v757 = vpop.f32.mrb[0].mxu0
        %758 = vmatprep.mubr.f32.mxu0 0.0
        %759 = vmatmul.mubr.f32.gmra.mrb[0].mxu0 %v667
        %v760 = vpop.f32.mrb[0].mxu0
        %v761 = vadd.f32 %v633, %v760
        %v762 = vpop.f32.mrb[0].mxu0
        %763 = vmatprep.mubr.f32.mxu0 0.0
        %764 = vmatmul.mubr.f32.gmra.mrb[0].mxu0 %v670
        %v765 = vpop.f32.mrb[0].mxu0
        %v766 = vadd.f32 %v638, %v765
        %v767 = vpop.f32.mrb[0].mxu0
        %768 = vmatprep.mubr.f32.mxu0 0.0
        %769 = vmatmul.mubr.f32.gmra.mrb[0].mxu0 %v673
        %v770 = vpop.f32.mrb[0].mxu0
        %v771 = vadd.f32 %v643, %v770
        %v772 = vpop.f32.mrb[0].mxu0
        %773 = vmatprep.mubr.f32.mxu0 0.0
        %774 = vmatmul.mubr.f32.gmra.mrb[0].mxu0 %v676
        %v775 = vpop.f32.mrb[0].mxu0
        %v776 = vadd.f32 %v648, %v775
        %v777 = vpop.f32.mrb[0].mxu0
        %778 = vmatprep.mubr.f32.mxu0 0.0
        %779 = vmatmul.mubr.f32.gmra.mrb[0].mxu0 %v679
        %v780 = vpop.f32.mrb[0].mxu0
        %v781 = vadd.f32 %v653, %v780
        %v782 = vpop.f32.mrb[0].mxu0
        %783 = vmatprep.mubr.f32.mxu0 0.0
        %784 = vmatmul.mubr.f32.gmra.mrb[0].mxu0 %v682
        %v785 = vpop.f32.mrb[0].mxu0
        %v786 = vadd.f32 %v658, %v785
        %v787 = vpop.f32.mrb[0].mxu0
        %788 = vdwg.mxu0
        %v789 = vmin.f32 %v751, 10.0
        %v790 = vmin.f32 %v756, 10.0
        %v791 = vmin.f32 %v761, 10.0
        %v792 = vmin.f32 %v766, 10.0
        %v793 = vmin.f32 %v771, 10.0
        %v794 = vmin.f32 %v776, 10.0
        %v795 = vmin.f32 %v781, 10.0
        %v796 = vmin.f32 %v786, 10.0
        %797 = vst [vmem:[%s326] sm:$0xff] %v789
        %798 = vst [vmem:[%s326 + $0x8] sm:$0xff] %v790
        %799 = vst [vmem:[%s326 + $0x10] sm:$0xff] %v791
        %800 = vst [vmem:[%s326 + $0x18] sm:$0xff] %v792
        %801 = vst [vmem:[%s333] sm:$0xff] %v793
        %802 = vst [vmem:[%s333 + $0x8] sm:$0xff] %v794
        %803 = vst [vmem:[%s333 + $0x10] sm:$0xff] %v795
        %804 = vst [vmem:[%s333 + $0x18] sm:$0xff] %v796
        %s805 = sand.u32 %s202, 1
        %s806 = scalar_lea.sflag [#allocation3], %s805
        %s807 = sand.u32 %s202, 1
        %s808 = smul.addr %s807, 32
        %s809 = scalar_lea.vmem [#allocation2], %s808
        %s810 = sand.u32 %s230, 1
        %s811 = scalar_lea.sflag [#allocation5], %s810
        %s812 = sand.u32 %s230, 1
        %s813 = smul.addr %s812, 32
        %s814 = scalar_lea.vmem [#allocation4], %s813
        // Predicated region
        $region49: #{tpu_custom_call.1} parent=47 // pred_check
          %p815 = pneg %p212
        $region50: #{tpu_custom_call.1} parent=47 // pred_check_branch
          %817 = sbr.rel (%p815) target = $region52
        $region51: #{tpu_custom_call.1} parent=47 // pred_region
          %s819 = ssub.s32 512, 512
          %820 = vsyncadd %s806, %s819
          %s821 = smul.addr %s30, 4
          %s822 = sadd.s32 %s31, %s821
          %s823 = smul.addr %s822, 128
          %s824 = scalar_lea.hbm %s7, %s823
          %s825 = sshll.u32 %s809, 4
          %s826 = int_to_ptr.vmem [resolvable:$true] %s825
          %831 = dma.vmem_to_hbm [thread:$0]  %s826, 512, %s824, %s806, 128, 128, 8
        $region52: #{tpu_custom_call.1} parent=47 // pred_fallthru
          _
        // Predicated region
        $region53: #{tpu_custom_call.1} parent=47 // pred_check
          %p832 = pneg %p240
        $region54: #{tpu_custom_call.1} parent=47 // pred_check_branch
          %834 = sbr.rel (%p832) target = $region56
        $region55: #{tpu_custom_call.1} parent=47 // pred_region
          %s836 = ssub.s32 512, 512
          %837 = vsyncadd %s811, %s836
          %s838 = smul.addr %s30, 4
          %s839 = sadd.s32 %s31, %s838
          %s840 = smul.addr %s839, 128
          %s841 = scalar_lea.hbm %s8, %s840
          %s842 = sshll.u32 %s814, 4
          %s843 = int_to_ptr.vmem [resolvable:$true] %s842
          %848 = dma.vmem_to_hbm [thread:$0]  %s843, 512, %s841, %s811, 128, 128, 8
        $region56: #{tpu_custom_call.1} parent=47 // pred_fallthru
          _
      $region48: #{tpu_custom_call.1} parent=5 // pred_fallthru
        _
      %p849 = scmp.le.s32.totalorder 2, %s21
      // Predicated region
      $region57: #{tpu_custom_call.1} parent=5 // pred_check
        %p850 = pneg %p849
      $region58: #{tpu_custom_call.1} parent=5 // pred_check_branch
        %852 = sbr.rel (%p850) target = $region60
      $region59: #{tpu_custom_call.1} parent=5 // pred_region
        %s853 = ssub.s32 %s21, 2
        // Predicated region
        $region61: #{tpu_custom_call.1} parent=59 // pred_check
          %p854 = pneg %p218
        $region62: #{tpu_custom_call.1} parent=59 // pred_check_branch
          %856 = sbr.rel (%p854) target = $region64
        $region63: #{tpu_custom_call.1} parent=59 // pred_region
          %s857 = sand.u32 %s203, 1
          %s858 = scalar_lea.sflag [#allocation3], %s857
          %s859 = sand.u32 %s203, 1
          %s860 = smul.addr %s859, 32
          %s861 = scalar_lea.vmem [#allocation2], %s860
          %862 = dma.done %s858, 512
        $region64: #{tpu_custom_call.1} parent=59 // pred_fallthru
          _
        // Predicated region
        $region65: #{tpu_custom_call.1} parent=59 // pred_check
          %p863 = pneg %p246
        $region66: #{tpu_custom_call.1} parent=59 // pred_check_branch
          %865 = sbr.rel (%p863) target = $region68
        $region67: #{tpu_custom_call.1} parent=59 // pred_region
          %s866 = sand.u32 %s231, 1
          %s867 = scalar_lea.sflag [#allocation5], %s866
          %s868 = sand.u32 %s231, 1
          %s869 = smul.addr %s868, 32
          %s870 = scalar_lea.vmem [#allocation4], %s869
          %871 = dma.done %s867, 512
        $region68: #{tpu_custom_call.1} parent=59 // pred_fallthru
          _
      $region60: #{tpu_custom_call.1} parent=5 // pred_fallthru
        _
    $region6: #{tpu_custom_call.1} parent=1 // loop_footer
      %s25 = sadd.s32 1, %s21
    $region7: #{tpu_custom_call.1} parent=1 // loop_footer_branch
      %20 = sbr.rel target = $region3
    $region8: #{tpu_custom_call.1} parent=1 // loop_exit
      _
    %872 = vsyncpa [#allocation3], 1
    %s873 = scalar_lea.sflag [#allocation3], 1
    %874 = vsyncpa %s873, 1
    %875 = vsyncpa [#allocation5], 1
    %s876 = scalar_lea.sflag [#allocation5], 1
    %877 = vsyncpa %s876, 1

</llo_original>
